<compile_context>
chip_gen: v7x
topology: tpu7x:2x2x1
jax: 0.10.0
libtpu: 0.0.40
codegen_flags: <defaults>
</compile_context>

<pallas_src>
import jax
import jax.numpy as jnp
from jax import lax
from jax.experimental import pallas as pl
from jax.experimental.pallas import tpu as pltpu


def _round_up(x, m):
    return ((x + m - 1) // m) * m


def _cat_proj_kernel(tok_ref, cid_ref, w_tok_ref, char_proj_ref, b_ref, out_ref):
    rt = tok_ref.shape[0]
    v = char_proj_ref.shape[0]
    num_chars = cid_ref.shape[1]

    # Token half: one MXU push against the pre-transposed bf16 token weight.
    acc = jnp.dot(tok_ref[...], w_tok_ref[...], preferred_element_type=jnp.float32)

    # Char half (gather + mean + project, fused):
    #   counts[r, x] = #{c : ids[r, c] == x}
    #   mean_c(char_table[ids[r, c]]) @ Wc == counts[r] @ (char_table @ Wc / C)
    #                                      == counts[r] @ char_proj
    # counts is built with VPU compares against a lane iota; C is tiny, so the
    # static Python loop fully unrolls.  No HBM intermediate, no XLU concat.
    ids = cid_ref[...]                                              # [rt, C] int32
    lane = lax.broadcasted_iota(jnp.int32, (rt, v), 1)              # [rt, V] int32
    counts = jnp.zeros((rt, v), jnp.float32)
    for c in range(num_chars):
        counts = counts + jnp.where(ids[:, c:c + 1] == lane, 1.0, 0.0)
    acc = acc + jnp.dot(counts.astype(char_proj_ref.dtype), char_proj_ref[...],
                        preferred_element_type=jnp.float32)

    # bf16 writeback (halves the dominant HBM stream of this mem-bound kernel).
    out_ref[...] = (acc + b_ref[...]).astype(out_ref.dtype)


def prepare_proj_params(proj_w, proj_b, char_table, *, token_dim, char_dim,
                        num_chars, act_dtype=jnp.bfloat16):
    """One-time prep of nn.Linear + char table into kernel layout.

    proj_w: [Dout, Dt+Dc] (PyTorch layout), proj_b: [Dout], char_table: [V, Dc].
    Returns:
      w_tok     [Dt, Dout]  bf16  (token half of W, pre-transposed)
      char_proj [V,  Dout]  bf16  (char_table @ Wc / C: char gather+mean+project
                                   collapse to a single counts @ char_proj matmul)
      b         [1,  Dout]  f32
    """
    dout, k = proj_w.shape
    assert k == token_dim + char_dim
    assert char_table.shape[1] == char_dim

    wT = jnp.transpose(proj_w).astype(jnp.float32)                  # [K, Dout], once
    w_tok = wT[:token_dim].astype(act_dtype)                        # [Dt, Dout]
    w_chr = wT[token_dim:]                                          # [Dc, Dout] f32
    char_proj = (char_table.astype(jnp.float32) @ w_chr) / float(num_chars)
    char_proj = char_proj.astype(act_dtype)                         # [V, Dout]
    b = proj_b.reshape(1, dout).astype(jnp.float32)
    return {"w_tok": w_tok, "char_proj": char_proj, "b": b,
            "dout": dout, "act_dtype": act_dtype}


def cat_embedding_project(tok_flat, char_ids_flat, kparams, *, row_tile=1024):
    """tok_flat: [N, Dt] bf16 token embeddings, char_ids_flat: [N, C] int32.

    Returns [N, Dout] bf16 = concat(tok, mean(char_table[ids])) @ W.T + b
    (char gather/mean folded into the kernel via counts @ char_proj).
    """
    n, dt = tok_flat.shape
    _, c = char_ids_flat.shape
    w_tok, char_proj, b = kparams["w_tok"], kparams["char_proj"], kparams["b"]
    v, dout = char_proj.shape
    assert w_tok.shape == (dt, dout)

    # Row tile: big (amortize ~0.35us per grid step), multiple of 16 for bf16
    # sublane packing, capped at 4096 (VMEM budget comfortable on v5e/v6e/v7x),
    # never over-tiling a tiny N, and >=2 grid steps when N allows (v7x megacore).
    rt = min(row_tile, 4096)
    rt = min(rt, _round_up(n, 16))
    if n >= 32:
        rt = min(rt, _round_up((n + 1) // 2, 16))
    rt = _round_up(rt, 16)
    grid = (pl.cdiv(n, rt),)   # partial last tile handled by Pallas masking: no jnp.pad

    out_dtype = kparams["act_dtype"]
    bytes_accessed = int(
        n * dt * tok_flat.dtype.itemsize
        + n * c * char_ids_flat.dtype.itemsize
        + dt * dout * w_tok.dtype.itemsize
        + v * dout * char_proj.dtype.itemsize
        + dout * 4
        + n * dout * jnp.dtype(out_dtype).itemsize)
    flops = 2 * n * dout * (dt + v)

    # NOTE: no pipeline_mode override / vmem_limit needed -- per-tile traffic at
    # rt<=4096 with these feature dims double-buffers to < 3 MiB.
    out = pl.pallas_call(
        _cat_proj_kernel,
        out_shape=jax.ShapeDtypeStruct((n, dout), out_dtype),
        grid_spec=pltpu.PrefetchScalarGridSpec(
            num_scalar_prefetch=0,
            grid=grid,
            in_specs=[
                pl.BlockSpec((rt, dt), lambda i: (i, 0)),      # token activations
                pl.BlockSpec((rt, c), lambda i: (i, 0)),       # raw char ids (int32)
                pl.BlockSpec((dt, dout), lambda i: (0, 0)),    # grid-invariant weights
                pl.BlockSpec((v, dout), lambda i: (0, 0)),
                pl.BlockSpec((1, dout), lambda i: (0, 0)),
            ],
            out_specs=pl.BlockSpec((rt, dout), lambda i: (i, 0)),
        ),
        compiler_params=pltpu.CompilerParams(
            dimension_semantics=("parallel",)),
        cost_estimate=pl.CostEstimate(
            flops=flops, transcendentals=0, bytes_accessed=bytes_accessed),
    )(tok_flat, char_ids_flat, w_tok, char_proj, b)
    return out


def cat_embedding_forward(features, params, kparams, *, row_tile=1024):
    """features = (token_ids [B,T] int32, char_ids [B,T,C] int32).

    Returns (combined [B,T,Dout] bf16, token_vec [B,T,Dt]) matching
    CatEmbedding.forward (token_vec in the table's storage dtype, bf16).
    """
    token_ids, char_ids = features
    B, T = token_ids.shape
    C = char_ids.shape[-1]

    # Token lookup stays in XLA glue (returned output; bf16 table -> gather
    # already produces the kernel activation dtype, no extra cast pass).
    token_vec = jnp.take(params["token_table"], token_ids, axis=0)   # [B, T, Dt]
    dt = token_vec.shape[-1]

    combined_flat = cat_embedding_project(
        token_vec.reshape(B * T, dt),
        char_ids.reshape(B * T, C),
        kparams,
        row_tile=row_tile,
    )
    combined = combined_flat.reshape(B, T, kparams["dout"])
    return combined, token_vec


if __name__ == "__main__":
    # --- deterministic setup ------------------------------------------------
    B, T, C = 2, 8, 4            # batch, num_tokens, chars per token
    vocab, char_vocab = 64, 32
    Dt, Dc, Dout = 32, 32, 48    # token emb dim, char emb dim, projection dim

    key = jax.random.PRNGKey(0)
    k1, k2, k3, k4, k5, k6 = jax.random.split(key, 6)

    token_table_f32 = jax.random.normal(k1, (vocab, Dt), dtype=jnp.float32) * 0.1
    char_table_f32 = jax.random.normal(k2, (char_vocab, Dc), dtype=jnp.float32) * 0.1
    proj_w = jax.random.normal(k3, (Dout, Dt + Dc), dtype=jnp.float32) * 0.05
    proj_b = jax.random.normal(k4, (Dout,), dtype=jnp.float32) * 0.01

    params = {
        # bf16 token table: the gather emits bf16 directly (no wrapper cast pass).
        "token_table": token_table_f32.astype(jnp.bfloat16),
        # char table only used at prep time (folded into char_proj in f32, then bf16).
        "char_table": char_table_f32,
        "proj_w": proj_w,
        "proj_b": proj_b,
    }

    token_ids = jax.random.randint(k5, (B, T), 0, vocab, dtype=jnp.int32)
    char_ids = jax.random.randint(k6, (B, T, C), 0, char_vocab, dtype=jnp.int32)

    # One-time kernel-layout prep (weight split, char table + mean folding, bias).
    kparams = prepare_proj_params(
        params["proj_w"], params["proj_b"], params["char_table"],
        token_dim=Dt, char_dim=Dc, num_chars=C,
        act_dtype=jnp.bfloat16)

    combined, token_vec = cat_embedding_forward((token_ids, char_ids), params, kparams)
    combined = jax.block_until_ready(combined)
    token_vec = jax.block_until_ready(token_vec)

    # --- reference check (f32 math on the model's actual stored params) ------
    tok_ref = jnp.take(params["token_table"], token_ids, axis=0)              # bf16
    chr_ref = jnp.mean(jnp.take(params["char_table"], char_ids, axis=0), axis=2)
    cat_ref = jnp.concatenate([tok_ref.astype(jnp.float32), chr_ref], axis=2)
    comb_ref = cat_ref @ params["proj_w"].T + params["proj_b"]

    assert combined.shape == (B, T, Dout)
    assert token_vec.shape == (B, T, Dt)
    # bf16 params / activations / output with f32 MXU accumulation -> widened tol.
    err = float(jnp.max(jnp.abs(combined.astype(jnp.float32) - comb_ref)))
    assert jnp.allclose(combined.astype(jnp.float32), comb_ref, atol=5e-3, rtol=5e-2), err
    assert jnp.array_equal(token_vec, tok_ref)
    print("KERNEL_OK")
</pallas_src>

<mosaic_0001>
module attributes {stable_mosaic.version = 11 : i64} {
  func.func @_cat_proj_kernel(%arg0: i32, %arg1: memref<16x32xbf16, #tpu.memory_space<vmem>>, %arg2: memref<16x4xi32, #tpu.memory_space<vmem>>, %arg3: memref<32x48xbf16, #tpu.memory_space<vmem>>, %arg4: memref<32x48xbf16, #tpu.memory_space<vmem>>, %arg5: memref<1x48xf32, #tpu.memory_space<vmem>>, %arg6: memref<16x48xbf16, #tpu.memory_space<vmem>>) attributes {dimension_semantics = [#tpu.dimension_semantics<parallel>], iteration_bounds = array<i64: 1>, scalar_prefetch = 0 : i64, scratch_operands = 0 : i64, tpu.core_type = #tpu.core_type<tc>, window_params = [{transform_indices = @transform_0, window_bounds = array<i64: 16, 32>}, {transform_indices = @transform_1, window_bounds = array<i64: 16, 4>}, {pipeline_mode = #tpu.pipeline_mode<synchronous>, transform_indices = @transform_2, window_bounds = array<i64: 32, 48>}, {pipeline_mode = #tpu.pipeline_mode<synchronous>, transform_indices = @transform_3, window_bounds = array<i64: 32, 48>}, {pipeline_mode = #tpu.pipeline_mode<synchronous>, transform_indices = @transform_4, window_bounds = array<i64: 1, 48>}, {transform_indices = @transform_5, window_bounds = array<i64: 16, 48>}]} {
    %c0 = arith.constant 0 : index
    %c0_0 = arith.constant 0 : index
    %0 = vector.load %arg1[%c0, %c0_0] : memref<16x32xbf16, #tpu.memory_space<vmem>>, vector<16x32xbf16>
    %c0_1 = arith.constant 0 : index
    %c0_2 = arith.constant 0 : index
    %1 = vector.load %arg3[%c0_1, %c0_2] : memref<32x48xbf16, #tpu.memory_space<vmem>>, vector<32x48xbf16>
    %cst = arith.constant dense<0.000000e+00> : vector<16x48xf32>
    %2 = tpu.matmul %0, %1, %cst {dimension_numbers = #tpu.dot_dimension_numbers<[1], [0], [0], [1], [0, 0, 1, 1], [], []>} : vector<16x32xbf16>, vector<32x48xbf16>, vector<16x48xf32> -> vector<16x48xf32>
    %c0_3 = arith.constant 0 : index
    %c0_4 = arith.constant 0 : index
    %3 = vector.load %arg2[%c0_3, %c0_4] : memref<16x4xi32, #tpu.memory_space<vmem>>, vector<16x4xi32>
    %4 = tpu.iota {dimensions = array<i32: 1>} : vector<16x32xi32>
    %cst_5 = arith.constant 0.000000e+00 : f32
    %5 = vector.broadcast %cst_5 : f32 to vector<16x32xf32>
    %6 = vector.extract_strided_slice %3 {offsets = [0, 0], sizes = [16, 1], strides = [1, 1]} : vector<16x4xi32> to vector<16x1xi32>
    %7 = vector.broadcast %6 : vector<16x1xi32> to vector<16x32xi32>
    %8 = arith.cmpi eq, %7, %4 : vector<16x32xi32>
    %cst_6 = arith.constant 1.000000e+00 : f32
    %cst_7 = arith.constant 0.000000e+00 : f32
    %9 = vector.broadcast %cst_6 : f32 to vector<16x32xf32>
    %10 = vector.broadcast %cst_7 : f32 to vector<16x32xf32>
    %11 = arith.select %8, %9, %10 : vector<16x32xi1>, vector<16x32xf32>
    %12 = arith.addf %5, %11 : vector<16x32xf32>
    %13 = vector.extract_strided_slice %3 {offsets = [0, 1], sizes = [16, 1], strides = [1, 1]} : vector<16x4xi32> to vector<16x1xi32>
    %14 = vector.broadcast %13 : vector<16x1xi32> to vector<16x32xi32>
    %15 = arith.cmpi eq, %14, %4 : vector<16x32xi32>
    %cst_8 = arith.constant 1.000000e+00 : f32
    %cst_9 = arith.constant 0.000000e+00 : f32
    %16 = vector.broadcast %cst_8 : f32 to vector<16x32xf32>
    %17 = vector.broadcast %cst_9 : f32 to vector<16x32xf32>
    %18 = arith.select %15, %16, %17 : vector<16x32xi1>, vector<16x32xf32>
    %19 = arith.addf %12, %18 : vector<16x32xf32>
    %20 = vector.extract_strided_slice %3 {offsets = [0, 2], sizes = [16, 1], strides = [1, 1]} : vector<16x4xi32> to vector<16x1xi32>
    %21 = vector.broadcast %20 : vector<16x1xi32> to vector<16x32xi32>
    %22 = arith.cmpi eq, %21, %4 : vector<16x32xi32>
    %cst_10 = arith.constant 1.000000e+00 : f32
    %cst_11 = arith.constant 0.000000e+00 : f32
    %23 = vector.broadcast %cst_10 : f32 to vector<16x32xf32>
    %24 = vector.broadcast %cst_11 : f32 to vector<16x32xf32>
    %25 = arith.select %22, %23, %24 : vector<16x32xi1>, vector<16x32xf32>
    %26 = arith.addf %19, %25 : vector<16x32xf32>
    %27 = vector.extract_strided_slice %3 {offsets = [0, 3], sizes = [16, 1], strides = [1, 1]} : vector<16x4xi32> to vector<16x1xi32>
    %28 = vector.broadcast %27 : vector<16x1xi32> to vector<16x32xi32>
    %29 = arith.cmpi eq, %28, %4 : vector<16x32xi32>
    %cst_12 = arith.constant 1.000000e+00 : f32
    %cst_13 = arith.constant 0.000000e+00 : f32
    %30 = vector.broadcast %cst_12 : f32 to vector<16x32xf32>
    %31 = vector.broadcast %cst_13 : f32 to vector<16x32xf32>
    %32 = arith.select %29, %30, %31 : vector<16x32xi1>, vector<16x32xf32>
    %33 = arith.addf %26, %32 : vector<16x32xf32>
    %34 = arith.truncf %33 : vector<16x32xf32> to vector<16x32xbf16>
    %c0_14 = arith.constant 0 : index
    %c0_15 = arith.constant 0 : index
    %35 = vector.load %arg4[%c0_14, %c0_15] : memref<32x48xbf16, #tpu.memory_space<vmem>>, vector<32x48xbf16>
    %cst_16 = arith.constant dense<0.000000e+00> : vector<16x48xf32>
    %36 = tpu.matmul %34, %35, %cst_16 {dimension_numbers = #tpu.dot_dimension_numbers<[1], [0], [0], [1], [0, 0, 1, 1], [], []>} : vector<16x32xbf16>, vector<32x48xbf16>, vector<16x48xf32> -> vector<16x48xf32>
    %37 = arith.addf %2, %36 : vector<16x48xf32>
    %c0_17 = arith.constant 0 : index
    %c0_18 = arith.constant 0 : index
    %38 = vector.load %arg5[%c0_17, %c0_18] : memref<1x48xf32, #tpu.memory_space<vmem>>, vector<1x48xf32>
    %39 = vector.broadcast %38 : vector<1x48xf32> to vector<16x48xf32>
    %40 = arith.addf %37, %39 : vector<16x48xf32>
    %41 = arith.truncf %40 : vector<16x48xf32> to vector<16x48xbf16>
    %c0_19 = arith.constant 0 : index
    %c0_20 = arith.constant 0 : index
    %42 = vector.load %arg6[%c0_19, %c0_20] : memref<16x48xbf16, #tpu.memory_space<vmem>>, vector<16x48xbf16>
    tpu.vector_store %arg6[%c0_19, %c0_20], %41 {strides = array<i32>} : memref<16x48xbf16, #tpu.memory_space<vmem>>, vector<16x48xbf16>,
    return
  }
  func.func @transform_0(%arg0: i32) -> (i32, i32) {
    %c0_i32 = arith.constant 0 : i32
    %c0_i32_0 = arith.constant 0 : i32
    return %arg0, %c0_i32 : i32, i32
  }
  func.func @transform_1(%arg0: i32) -> (i32, i32) {
    %c0_i32 = arith.constant 0 : i32
    %c0_i32_0 = arith.constant 0 : i32
    return %arg0, %c0_i32 : i32, i32
  }
  func.func @transform_2(%arg0: i32) -> (i32, i32) {
    %c0_i32 = arith.constant 0 : i32
    %c0_i32_0 = arith.constant 0 : i32
    %c0_i32_1 = arith.constant 0 : i32
    return %c0_i32, %c0_i32_0 : i32, i32
  }
  func.func @transform_3(%arg0: i32) -> (i32, i32) {
    %c0_i32 = arith.constant 0 : i32
    %c0_i32_0 = arith.constant 0 : i32
    %c0_i32_1 = arith.constant 0 : i32
    return %c0_i32, %c0_i32_0 : i32, i32
  }
  func.func @transform_4(%arg0: i32) -> (i32, i32) {
    %c0_i32 = arith.constant 0 : i32
    %c0_i32_0 = arith.constant 0 : i32
    %c0_i32_1 = arith.constant 0 : i32
    return %c0_i32, %c0_i32_0 : i32, i32
  }
  func.func @transform_5(%arg0: i32) -> (i32, i32) {
    %c0_i32 = arith.constant 0 : i32
    %c0_i32_0 = arith.constant 0 : i32
    return %arg0, %c0_i32 : i32, i32
  }
}

</mosaic_0001>

<llo_original>
// kernel: tpu_custom_call.1
$region0: #{tpu_custom_call.1}
  #allocation0 [shape = 'u32[]', space=smem, size = 0x4, offset = 0x4, fixed_abs, tag = 'smem constant byte address 0x4 - core index']
  #allocation1 [shape = 'u32[144,128]{1,0:T(1,128)}', space=vmem, size = 0x12000, scoped, tag = 'internal scratch']
  %s0 = inlined_call_operand.vmem [shape: bf16[16,32], index: 0, kind: input, shape index: {}]
  %s1 = inlined_call_operand.vmem [shape: s32[16,4], index: 1, kind: input, shape index: {}]
  %s2 = inlined_call_operand.vmem [shape: bf16[32,48], index: 2, kind: input, shape index: {}]
  %s3 = inlined_call_operand.hbm [shape: bf16[32,48], index: 3, kind: input, shape index: {}]
  %s4 = inlined_call_operand.vmem [shape: f32[1,48], index: 4, kind: input, shape index: {}]
  %s5 = inlined_call_operand.hbm [shape: bf16[16,48], index: 5, kind: output, shape index: {}]
  %s6 = sld [smem:[#allocation0]]
  $region34: #{tpu_custom_call.1} parent=0
    _
  %s8 = ssub.s32 1, %s6
  %s9 = scalar_select 0, %s8, %s6
  $region1: #{tpu_custom_call.1} parent=0
    #allocation2 [shape = 'u8[8192]{0}', space=vmem, size = 0x2000, scoped, tag = 'input window, operand 3, single buffered']
    #allocation3 [shape = 's32[1]{0}', space=sflag, size = 0x4, scoped, tag = 'scoped memory for tpu_custom_call.1']
    #allocation4 [shape = 's32[1]{0}', space=sflag, size = 0x4, scoped, tag = 'scoped memory for tpu_custom_call.1']
    #allocation5 [shape = 'u8[4096]{0}', space=vmem, size = 0x1000, scoped, tag = 'output window, operand 0, single buffered']
    %10 = vsyncpa [#allocation3], 0
    %11 = vsyncpa [#allocation4], 0
    // Predicated region
    $region2: #{tpu_custom_call.1} parent=1 // pred_check
      _
    $region3: #{tpu_custom_call.1} parent=1 // pred_check_branch
      %13 = sbr.rel (0) target = $region5
    $region4: #{tpu_custom_call.1} parent=1 // pred_region
      _
    $region5: #{tpu_custom_call.1} parent=1 // pred_fallthru
      _
    // Predicated region
    $region6: #{tpu_custom_call.1} parent=1 // pred_check
      _
    $region7: #{tpu_custom_call.1} parent=1 // pred_check_branch
      %15 = sbr.rel (0) target = $region9
    $region8: #{tpu_custom_call.1} parent=1 // pred_region
      _
    $region9: #{tpu_custom_call.1} parent=1 // pred_fallthru
      _
    // Predicated region
    $region10: #{tpu_custom_call.1} parent=1 // pred_check
      _
    $region11: #{tpu_custom_call.1} parent=1 // pred_check_branch
      %17 = sbr.rel (0) target = $region13
    $region12: #{tpu_custom_call.1} parent=1 // pred_region
      _
    $region13: #{tpu_custom_call.1} parent=1 // pred_fallthru
      _
    // Predicated region
    $region14: #{tpu_custom_call.1} parent=1 // pred_check
      _
    $region15: #{tpu_custom_call.1} parent=1 // pred_check_branch
      %19 = sbr.rel (0) target = $region17
    $region16: #{tpu_custom_call.1} parent=1 // pred_region
      %s21 = ssub.s32 256, 256
      %22 = vsyncadd [#allocation3], %s21
      %s23 = sshll.u32 [#allocation2], 4
      %s24 = int_to_ptr.vmem [resolvable:$true] %s23
      %29 = dma.hbm_to_vmem [thread:$0]  %s3, 256, %s24, [#allocation3], 64, 64, 4
    $region17: #{tpu_custom_call.1} parent=1 // pred_fallthru
      _
    // Predicated region
    $region18: #{tpu_custom_call.1} parent=1 // pred_check
      _
    $region19: #{tpu_custom_call.1} parent=1 // pred_check_branch
      %31 = sbr.rel (0) target = $region21
    $region20: #{tpu_custom_call.1} parent=1 // pred_region
      _
    $region21: #{tpu_custom_call.1} parent=1 // pred_fallthru
      _
    // Predicated region
    $region22: #{tpu_custom_call.1} parent=1 // pred_check
      _
    $region23: #{tpu_custom_call.1} parent=1 // pred_check_branch
      %33 = sbr.rel (0) target = $region25
    $region24: #{tpu_custom_call.1} parent=1 // pred_region
      %34 = dma.done [#allocation3], 256
    $region25: #{tpu_custom_call.1} parent=1 // pred_fallthru
      _
    %v36 = vld [vmem:[%s0] sm:$0xf]
    %v37 = vld [vmem:[%s0 + $0x4] sm:$0xf]
    %v38 = vld [vmem:[%s2] sm:$0xf]
    %v39 = vld [vmem:[%s2 + $0x4] sm:$0xf]
    %v40 = vld [vmem:[%s2 + $0x8] sm:$0xf]
    %v41 = vld [vmem:[%s2 + $0xc] sm:$0xf]
    %v42 = vld [vmem:[%s1] sm:$0xff]
    %v43 = vld [vmem:[%s1 + $0x8] sm:$0xff]
    %v44 = vlaneseq
    %v45 = vand.u32 %v44, 127
    %46 = vset.pattern.permute.xlu0 0
    %47 = vperm.xlu0 %46, %v42
    %v48 = vpop.permute.xlu0 %47
    %49 = vset.pattern.permute.xlu0 0
    %50 = vperm.xlu0 %49, %v43
    %v51 = vpop.permute.xlu0 %50
    %vm52 = vcmp.eq.s32.totalorder %v48, %v45
    %vm53 = vcmp.eq.s32.totalorder %v51, %v45
    %v54 = vsel %vm52, 1.0, 0.0
    %v55 = vsel %vm53, 1.0, 0.0
    %v56 = vadd.f32 %v54, 0.0
    %v57 = vadd.f32 %v55, 0.0
    %58 = vset.pattern.permute.xlu0 1
    %59 = vperm.xlu0 %58, %v42
    %v60 = vpop.permute.xlu0 %59
    %61 = vset.pattern.permute.xlu0 1
    %62 = vperm.xlu0 %61, %v43
    %v63 = vpop.permute.xlu0 %62
    %vm64 = vcmp.eq.s32.totalorder %v60, %v45
    %vm65 = vcmp.eq.s32.totalorder %v63, %v45
    %v66 = vsel %vm64, 1.0, 0.0
    %v67 = vsel %vm65, 1.0, 0.0
    %v68 = vadd.f32 %v56, %v66
    %v69 = vadd.f32 %v57, %v67
    %70 = vset.pattern.permute.xlu0 2
    %71 = vperm.xlu0 %70, %v42
    %v72 = vpop.permute.xlu0 %71
    %73 = vset.pattern.permute.xlu0 2
    %74 = vperm.xlu0 %73, %v43
    %v75 = vpop.permute.xlu0 %74
    %vm76 = vcmp.eq.s32.totalorder %v72, %v45
    %vm77 = vcmp.eq.s32.totalorder %v75, %v45
    %v78 = vsel %vm76, 1.0, 0.0
    %v79 = vsel %vm77, 1.0, 0.0
    %v80 = vadd.f32 %v68, %v78
    %v81 = vadd.f32 %v69, %v79
    %82 = vset.pattern.permute.xlu0 3
    %83 = vperm.xlu0 %82, %v42
    %v84 = vpop.permute.xlu0 %83
    %85 = vset.pattern.permute.xlu0 3
    %86 = vperm.xlu0 %85, %v43
    %v87 = vpop.permute.xlu0 %86
    %vm88 = vcmp.eq.s32.totalorder %v84, %v45
    %vm89 = vcmp.eq.s32.totalorder %v87, %v45
    %v90 = vsel %vm88, 1.0, 0.0
    %v91 = vsel %vm89, 1.0, 0.0
    %v92 = vadd.f32 %v80, %v90
    %v93 = vadd.f32 %v81, %v91
    %v94 = vpack.c.bf16 %v93, %v92
    %v95 = vld [vmem:[#allocation2] sm:$0xf]
    %v96 = vld [vmem:[#allocation2 + $0x4] sm:$0xf]
    %v97 = vld [vmem:[#allocation2 + $0x8] sm:$0xf]
    %v98 = vld [vmem:[#allocation2 + $0xc] sm:$0xf]
    %v103 = vunpack.c.l.b16 %v95
    %v104 = vunpack.c.l.b16 %v96
    %v105 = vunpack.c.l.b16 %v97
    %v106 = vunpack.c.l.b16 %v98
    %v107 = vpack.c.b16 %v104, %v103
    %v108 = vpack.c.b16 %v106, %v105
    %vm111 = vcmask 261120
    %v113 = vsel %vm111, %v94, 0
    %115 = vmatprep.subr.bf16.mxu0 0
    %116 = vmatpush1.bf16.msra.mxu0 %v107
    %117 = vmatprep.subr.bf16.mxu0 0
    %118 = vmatpush1.bf16.msra.mxu0 %v108
    %119 = vmatprep.subr.bf16.mxu0 0
    %120 = vmatpush1.bf16.msra.mxu0 0
    %121 = vmatprep.subr.bf16.mxu0 0
    %122 = vmatpush1.bf16.msra.mxu0 0
    %123 = vmatprep.subr.bf16.mxu0 0
    %124 = vmatpush1.bf16.msra.mxu0 0
    %125 = vmatprep.subr.bf16.mxu0 0
    %126 = vmatpush1.bf16.msra.mxu0 0
    %127 = vmatprep.subr.bf16.mxu0 0
    %128 = vmatpush1.bf16.msra.mxu0 0
    %129 = vmatprep.subr.bf16.mxu0 0
    %130 = vmatpush1.bf16.msra.mxu0 0
    %131 = vmatprep.subr.bf16.mxu0 0
    %132 = vmatpush1.bf16.msra.mxu0 0
    %133 = vmatprep.subr.bf16.mxu0 0
    %134 = vmatpush1.bf16.msra.mxu0 0
    %135 = vmatprep.subr.bf16.mxu0 0
    %136 = vmatpush1.bf16.msra.mxu0 0
    %137 = vmatprep.subr.bf16.mxu0 0
    %138 = vmatpush1.bf16.msra.mxu0 0
    %139 = vmatprep.subr.bf16.mxu0 0
    %140 = vmatpush1.bf16.msra.mxu0 0
    %141 = vmatprep.subr.bf16.mxu0 0
    %142 = vmatpush1.bf16.msra.mxu0 0
    %143 = vmatprep.subr.bf16.mxu0 0
    %144 = vmatpush1.bf16.msra.mxu0 0
    %145 = vmatprep.subr.bf16.mxu0 0
    %146 = vmatpush1.bf16.msra.mxu0 0
    %147 = vmatprep.mubr.bf16.mxu0 0
    %148 = vmatmul.mubr.bf16.gmra.mrb[0].mxu0 %v113
    %v149 = vpop.f32.mrb[0].mxu0
    %v150 = vadd.f32 0.0, %v149
    %v151 = vpop.f32.mrb[0].mxu0
    %v152 = vpop.f32.mrb[0].mxu0
    %v153 = vadd.f32 0.0, %v152
    %v154 = vpop.f32.mrb[0].mxu0
    %155 = vdwg.mxu0
    %v158 = vunpack.c.l.b16 %v36
    %v159 = vunpack.c.l.b16 %v37
    %v160 = vpack.c.b16 %v159, %v158
    %v165 = vunpack.c.l.b16 %v38
    %v166 = vunpack.c.l.b16 %v39
    %v167 = vunpack.c.l.b16 %v40
    %v168 = vunpack.c.l.b16 %v41
    %v169 = vpack.c.b16 %v166, %v165
    %v170 = vpack.c.b16 %v168, %v167
    %v174 = vsel %vm111, %v160, 0
    %176 = vmatprep.subr.bf16.mxu0 0
    %177 = vmatpush1.bf16.msra.mxu0 %v169
    %178 = vmatprep.subr.bf16.mxu0 0
    %179 = vmatpush1.bf16.msra.mxu0 %v170
    %180 = vmatprep.subr.bf16.mxu0 0
    %181 = vmatpush1.bf16.msra.mxu0 0
    %182 = vmatprep.subr.bf16.mxu0 0
    %183 = vmatpush1.bf16.msra.mxu0 0
    %184 = vmatprep.subr.bf16.mxu0 0
    %185 = vmatpush1.bf16.msra.mxu0 0
    %186 = vmatprep.subr.bf16.mxu0 0
    %187 = vmatpush1.bf16.msra.mxu0 0
    %188 = vmatprep.subr.bf16.mxu0 0
    %189 = vmatpush1.bf16.msra.mxu0 0
    %190 = vmatprep.subr.bf16.mxu0 0
    %191 = vmatpush1.bf16.msra.mxu0 0
    %192 = vmatprep.subr.bf16.mxu0 0
    %193 = vmatpush1.bf16.msra.mxu0 0
    %194 = vmatprep.subr.bf16.mxu0 0
    %195 = vmatpush1.bf16.msra.mxu0 0
    %196 = vmatprep.subr.bf16.mxu0 0
    %197 = vmatpush1.bf16.msra.mxu0 0
    %198 = vmatprep.subr.bf16.mxu0 0
    %199 = vmatpush1.bf16.msra.mxu0 0
    %200 = vmatprep.subr.bf16.mxu0 0
    %201 = vmatpush1.bf16.msra.mxu0 0
    %202 = vmatprep.subr.bf16.mxu0 0
    %203 = vmatpush1.bf16.msra.mxu0 0
    %204 = vmatprep.subr.bf16.mxu0 0
    %205 = vmatpush1.bf16.msra.mxu0 0
    %206 = vmatprep.subr.bf16.mxu0 0
    %207 = vmatpush1.bf16.msra.mxu0 0
    %208 = vmatprep.mubr.bf16.mxu0 0
    %209 = vmatmul.mubr.bf16.gmra.mrb[0].mxu0 %v174
    %v210 = vpop.f32.mrb[0].mxu0
    %v211 = vadd.f32 %v150, %v210
    %v212 = vpop.f32.mrb[0].mxu0
    %v213 = vpop.f32.mrb[0].mxu0
    %v214 = vadd.f32 %v153, %v213
    %v215 = vpop.f32.mrb[0].mxu0
    %216 = vdwg.mxu0
    %v217 = vld [vmem:[%s4] sm:$0x1]
    %v219 = vlaneseq
    %v220 = vshrl.u32 %v219, 7
    %v221 = vsub.s32 0, %v220
    %v222 = vrot.slane %v217, %v221
    %v224 = vadd.f32 %v211, %v222
    %v225 = vadd.f32 %v214, %v222
    %v226 = vpack.c.bf16 %v225, %v224
    %v228 = vunpack.c.l.b16 %v226
    %v229 = vunpack.c.h.b16 %v226
    %v230 = vpack.c.b16 %v228, %v228
    %v231 = vpack.c.b16 %v229, %v229
    %vm234 = vcmask 388096
    %235 = vst.msk [vmem:[#allocation5] sm:$0xf] %vm234, %v230
    %236 = vst.msk [vmem:[#allocation5 + $0x4] sm:$0xf] %vm234, %v231
    // Predicated region
    $region26: #{tpu_custom_call.1} parent=1 // pred_check
      _
    $region27: #{tpu_custom_call.1} parent=1 // pred_check_branch
      %238 = sbr.rel (0) target = $region29
    $region28: #{tpu_custom_call.1} parent=1 // pred_region
      %s240 = ssub.s32 128, 128
      %241 = vsyncadd [#allocation4], %s240
      %s242 = sshll.u32 [#allocation5], 4
      %s243 = int_to_ptr.vmem [resolvable:$true] %s242
      %248 = dma.vmem_to_hbm [thread:$0]  %s243, 128, %s5, [#allocation4], 64, 64, 4
    $region29: #{tpu_custom_call.1} parent=1 // pred_fallthru
      _
    // Predicated region
    $region30: #{tpu_custom_call.1} parent=1 // pred_check
      _
    $region31: #{tpu_custom_call.1} parent=1 // pred_check_branch
      %250 = sbr.rel (0) target = $region33
    $region32: #{tpu_custom_call.1} parent=1 // pred_region
      %251 = dma.done [#allocation4], 128
    $region33: #{tpu_custom_call.1} parent=1 // pred_fallthru
      _
    %252 = vsyncpa [#allocation3], 1
    %253 = vsyncpa [#allocation4], 1

</llo_original>
